<compile_context>
chip_gen: v5e
topology: v5e:2x2
jax: 0.10.0
libtpu: 0.0.40
codegen_flags: <defaults>
</compile_context>

<pallas_src>
import functools

import jax
import jax.numpy as jnp
from jax.experimental import pallas as pl
from jax.experimental.pallas import tpu as pltpu


# --------------------------------------------------------------------------- #
# Helpers
# --------------------------------------------------------------------------- #
def _gated_tanh(x, wf, bf, wg, bg):
    return jnp.tanh(x @ wf + bf) * jax.nn.sigmoid(x @ wg + bg)


def _round_up(x, m):
    return ((x + m - 1) // m) * m


def _vmem_capacity_bytes():
    """Physical VMEM per core; falls back to the v7x-sized 64 MiB if unknown."""
    try:
        return int(pltpu.get_tpu_info().vmem_capacity_bytes)
    except Exception:
        return 64 * 1024 * 1024


def _choose_tiles(B, L_pad, D_img, H, mm_itemsize, budget,
                  batch_block=None, h_block=None):
    """Pick (TB, TH, H_pad, nk) under a VMEM byte budget.

    Preference order:
      1) full-H resident weight (streamed once for the whole grid), any TB;
      2) chunked H with the largest TB that fits (weight re-streams once per
         batch tile, so minimizing nb matters more than TH).
    """

    def vmem_need(TB, TH):
        w = 2 * D_img * 2 * TH * mm_itemsize        # fused weight (2 pipeline bufs)
        img = 2 * TB * L_pad * D_img * mm_itemsize  # image tile double buffer
        q = 2 * TB * TH * 4                         # q_scaled chunk
        bias = 2 * 2 * TH * 4
        act = 16 * TB * L_pad * TH                  # z / image_fa / joint f32 temps
        io = 3 * TB * L_pad * 4                     # acc scratch + out double buffer
        return w + img + q + bias + act + io

    # H tiling candidates.
    if h_block is not None:
        assert h_block == H or h_block % 128 == 0, \
            "h_block must equal H or be a multiple of 128"
        H_pad = H if h_block == H else _round_up(H, h_block)
        h_opts = [(H_pad, h_block, H_pad // h_block)]
    else:
        h_opts = [(H, H, 1)]                        # full-H resident weight
        H_pad128 = _round_up(H, 128)
        for th in (1024, 640, 512, 384, 256, 128):
            if th < H_pad128 and H_pad128 % th == 0:
                h_opts.append((H_pad128, th, H_pad128 // th))

    # Batch tiling candidates, biggest first.
    if batch_block is not None:
        TB = min(batch_block, B)
        assert TB == B or TB % 8 == 0, "batch_block must be B or a multiple of 8"
        tb_opts = [TB]
    elif B <= 8:
        tb_opts = [B]
    else:
        tb_opts = sorted({B} | set(range(8, B, 8)), reverse=True)

    candidates = []
    for TB in tb_opts:                              # full-H residency first
        candidates.append((TB,) + h_opts[0])
    for TB in tb_opts:                              # then chunked, large TB first
        for opt in h_opts[1:]:
            candidates.append((TB,) + opt)

    for TB, H_pad, TH, nk in candidates:
        if vmem_need(TB, TH) <= budget:
            return TB, TH, H_pad, nk

    # Fallback: smallest candidates even if the estimate says it is over budget.
    H_pad, TH, nk = h_opts[-1]
    return tb_opts[-1], TH, H_pad, nk


# --------------------------------------------------------------------------- #
# Kernel
# --------------------------------------------------------------------------- #
def _top_down_attention_kernel(
    img_ref,    # (TB, L_pad, D_img)   image features (matmul dtype)
    qs_ref,     # (TB, TH)             question GatedTanh * w_lc, chunk k (f32)
    wimg_ref,   # (D_img, 2*TH)        fused [fc_k | gate_k] weight chunk
    bimg_ref,   # (1, 2*TH)            fused bias chunk (f32)
    out_ref,    # (TB, L_pad)          attention weights (f32)
    acc_ref,    # (TB, L_pad) f32      raw-logit accumulator over H chunks
    *, l_actual, act_dtype,
):
    k = pl.program_id(1)

    @pl.when(k == 0)
    def _():
        acc_ref[...] = jnp.zeros_like(acc_ref)

    TB, L, D = img_ref.shape
    TH = qs_ref.shape[1]

    # One fused (fc | gate) matmul over all TB*L image rows of this tile.
    # L is padded to a multiple of 8 in the wrapper, so this reshape is a pure
    # re-indexing of sublane tiles (no relayout copy).
    img2 = img_ref[...].reshape(TB * L, D)
    z = jnp.dot(img2, wimg_ref[...], preferred_element_type=jnp.float32)
    z = (z + bimg_ref[...]).astype(act_dtype)
    image_fa = jnp.tanh(z[:, :TH]) * jax.nn.sigmoid(z[:, TH:])          # (TB*L, TH)

    # w_lc is already folded into qs (= question GatedTanh * w_lc) and b_lc is
    # dropped (softmax-invariant), so Linear(H, 1) reduces to a VPU multiply +
    # lane reduction.  Dropout(p=0.2) is inference-mode identity.
    joint = image_fa.reshape(TB, L, TH) * qs_ref[...].astype(act_dtype)[:, None, :]
    acc_ref[...] += jnp.sum(joint.astype(jnp.float32), axis=-1)

    @pl.when(k == pl.num_programs(1) - 1)
    def _():
        raw = acc_ref[...]                                              # (TB, L)
        if l_actual < L:  # static: mask padded image locations out of the softmax
            loc = jax.lax.broadcasted_iota(jnp.int32, raw.shape, 1)
            raw = jnp.where(loc < l_actual, raw, -jnp.inf)
        m = jnp.max(raw, axis=1, keepdims=True)
        e = jnp.exp(raw - m)
        denom = jnp.sum(e, axis=1, keepdims=True)
        out_ref[...] = (e * pl.reciprocal(denom, approx=True)).astype(out_ref.dtype)


# --------------------------------------------------------------------------- #
# Wrapper
# --------------------------------------------------------------------------- #
def top_down_attention(image_feat, question_embedding, params, *,
                       batch_block=None, h_block=None,
                       matmul_dtype=jnp.bfloat16,
                       activation_dtype=jnp.float32):
    """TopDownAttention forward (softmax normalization, image_locs=None).

    Returns the (B, L, 1) attention weights in float32, matching the PyTorch
    module's forward output.  `activation_dtype=jnp.bfloat16` is a valid
    option on v6e/v7x (bf16 VPU/EUP); keep float32 on v5e.
    """
    B, L, D_img = image_feat.shape
    H = params["w_i_fc"].shape[1]
    mm_itemsize = jnp.dtype(matmul_dtype).itemsize

    # ---- hoisted text branch: tiny (B, D_txt) matmuls, plain XLA ------------
    q_fa = _gated_tanh(
        question_embedding,
        params["w_t_fc"], params["b_t_fc"],
        params["w_t_gate"], params["b_t_gate"],
    )
    # Fold the Linear(H, 1) weight into the question branch; b_lc dropped
    # because softmax(x + c) == softmax(x).
    q_scaled = (q_fa * params["w_lc"].reshape(1, H)).astype(jnp.float32)   # (B, H)

    # ---- tile / VMEM planning ------------------------------------------------
    vmem_cap = _vmem_capacity_bytes()
    budget = int(vmem_cap * 0.65)
    L_pad = _round_up(L, 8)
    TB, TH, H_pad, nk = _choose_tiles(B, L_pad, D_img, H, mm_itemsize, budget,
                                      batch_block=batch_block, h_block=h_block)
    nb = pl.cdiv(B, TB)

    # ---- pad L (sublane alignment; masked in softmax) and H (lane chunks) ----
    img = image_feat
    if L_pad != L:
        img = jnp.pad(img, ((0, 0), (0, L_pad - L), (0, 0)))
    img = img.astype(matmul_dtype)

    wf, wg = params["w_i_fc"], params["w_i_gate"]
    bf, bg = params["b_i_fc"].reshape(1, H), params["b_i_gate"].reshape(1, H)
    if H_pad != H:
        padH = ((0, 0), (0, H_pad - H))
        wf, wg = jnp.pad(wf, padH), jnp.pad(wg, padH)
        bf, bg = jnp.pad(bf, padH), jnp.pad(bg, padH)
        q_scaled = jnp.pad(q_scaled, padH)   # zero columns -> zero logit contribution

    # Chunk-interleaved fused weight: chunk k carries [fc_k | gate_k].
    w_img = jnp.stack([wf.reshape(D_img, nk, TH), wg.reshape(D_img, nk, TH)],
                      axis=2).reshape(D_img, 2 * H_pad).astype(matmul_dtype)
    b_img = jnp.stack([bf.reshape(1, nk, TH), bg.reshape(1, nk, TH)],
                      axis=2).reshape(1, 2 * H_pad).astype(jnp.float32)

    kernel = functools.partial(_top_down_attention_kernel,
                               l_actual=L, act_dtype=activation_dtype)

    grid_spec = pltpu.PrefetchScalarGridSpec(
        num_scalar_prefetch=0,
        grid=(nb, nk),                                    # (batch tiles, H chunks)
        in_specs=[
            pl.BlockSpec((TB, L_pad, D_img), lambda b, k: (b, 0, 0)),   # image rows
            pl.BlockSpec((TB, TH),           lambda b, k: (b, k)),      # q_fa * w_lc
            # When nk == 1 the block index below is constant over the whole
            # grid, so the fused weight/bias are DMA'd exactly once (resident).
            pl.BlockSpec((D_img, 2 * TH),    lambda b, k: (0, k)),      # fused weight
            pl.BlockSpec((1, 2 * TH),        lambda b, k: (0, k)),      # fused bias
        ],
        out_specs=pl.BlockSpec((TB, L_pad), lambda b, k: (b, 0)),
        scratch_shapes=[pltpu.VMEM((TB, L_pad), jnp.float32)],
    )

    attn = pl.pallas_call(
        kernel,
        out_shape=jax.ShapeDtypeStruct((B, L_pad), jnp.float32),
        grid_spec=grid_spec,
        compiler_params=pltpu.CompilerParams(
            dimension_semantics=("parallel", "arbitrary"),
            vmem_limit_bytes=int(vmem_cap * 0.85),
        ),
    )(img, q_scaled, w_img, b_img)

    # (B, L, 1), float32 — identical to the PyTorch module output.  The expand
    # to image_feat.shape is a view in PyTorch; leave it to the consumer.
    return attn[:, :L, None]


# --------------------------------------------------------------------------- #
# Pure-JAX reference (matches the PyTorch forward, eval mode, image_locs=None)
# --------------------------------------------------------------------------- #
def top_down_attention_ref(image_feat, question_embedding, params):
    image_fa = _gated_tanh(image_feat, params["w_i_fc"], params["b_i_fc"],
                           params["w_i_gate"], params["b_i_gate"])      # (B, L, H)
    question_fa = _gated_tanh(question_embedding, params["w_t_fc"], params["b_t_fc"],
                              params["w_t_gate"], params["b_t_gate"])   # (B, H)
    joint = image_fa * question_fa[:, None, :]
    raw = joint @ params["w_lc"] + params["b_lc"]                       # (B, L, 1)
    return jax.nn.softmax(raw, axis=1)


def make_params(key, d_img, d_txt, hidden):
    ks = jax.random.split(key, 10)
    s = lambda fan_in: 1.0 / jnp.sqrt(fan_in)
    u = lambda k, shape, fan_in: jax.random.uniform(
        k, shape, jnp.float32, -s(fan_in), s(fan_in))
    return {
        "w_i_fc":   u(ks[0], (d_img, hidden), d_img),
        "b_i_fc":   u(ks[1], (1, hidden), d_img),
        "w_i_gate": u(ks[2], (d_img, hidden), d_img),
        "b_i_gate": u(ks[3], (1, hidden), d_img),
        "w_t_fc":   u(ks[4], (d_txt, hidden), d_txt),
        "b_t_fc":   u(ks[5], (1, hidden), d_txt),
        "w_t_gate": u(ks[6], (d_txt, hidden), d_txt),
        "b_t_gate": u(ks[7], (1, hidden), d_txt),
        "w_lc":     u(ks[8], (hidden, 1), hidden),
        "b_lc":     u(ks[9], (1, 1), hidden),
    }


def _run_case(B, L, d_img, d_txt, hidden, *, matmul_dtype, atol, rtol,
              h_block=None, batch_block=None, seed=0):
    key = jax.random.PRNGKey(seed)
    k_img, k_q, k_p = jax.random.split(key, 3)
    image_feat = jax.random.normal(k_img, (B, L, d_img), jnp.float32)
    question_embedding = jax.random.normal(k_q, (B, d_txt), jnp.float32)
    params = make_params(k_p, d_img, d_txt, hidden)

    out = jax.block_until_ready(
        top_down_attention(image_feat, question_embedding, params,
                           matmul_dtype=matmul_dtype,
                           h_block=h_block, batch_block=batch_block))
    ref = top_down_attention_ref(image_feat, question_embedding, params)

    assert out.shape == (B, L, 1), out.shape
    assert jnp.allclose(out, ref, atol=atol, rtol=rtol), (
        f"mismatch vs reference (B={B}, L={L}, D={d_img}, H={hidden}, "
        f"dtype={matmul_dtype})")


if __name__ == "__main__":
    # Small toy shapes, f32 matmuls, single H chunk, fully resident weight.
    _run_case(2, 16, 32, 32, 32, matmul_dtype=jnp.float32,
              atol=2e-3, rtol=2e-3, seed=0)

    # L=36 (real pythia grid size) -> L padded to 40 with masked softmax;
    # H=200 padded to 256 and chunked (TH=128, nk=2) -> accumulator path.
    _run_case(8, 36, 64, 48, 200, matmul_dtype=jnp.float32,
              h_block=128, atol=2e-3, rtol=2e-3, seed=1)

    # Default bf16 matmul path with batch tiling (TB=8, nb=2) and a resident
    # full-H weight (constant block index -> DMA'd once for both batch tiles).
    _run_case(16, 16, 64, 48, 1024, matmul_dtype=jnp.bfloat16,
              batch_block=8, atol=2e-2, rtol=2e-2, seed=2)

    print("KERNEL_OK")
</pallas_src>

<mosaic_0001>
module attributes {stable_mosaic.version = 11 : i64} {
  func.func @_top_down_attention_kernel(%arg0: i32, %arg1: i32, %arg2: memref<2x16x32xf32, #tpu.memory_space<vmem>>, %arg3: memref<2x32xf32, #tpu.memory_space<vmem>>, %arg4: memref<32x64xf32, #tpu.memory_space<vmem>>, %arg5: memref<1x64xf32, #tpu.memory_space<vmem>>, %arg6: memref<2x16xf32, #tpu.memory_space<vmem>>, %arg7: memref<2x16xf32, #tpu.memory_space<vmem>>) attributes {dimension_semantics = [#tpu.dimension_semantics<parallel>, #tpu.dimension_semantics<arbitrary>], iteration_bounds = array<i64: 1, 1>, scalar_prefetch = 0 : i64, scratch_operands = 1 : i64, tpu.core_type = #tpu.core_type<tc>, window_params = [{transform_indices = @transform_0, window_bounds = array<i64: 2, 16, 32>}, {transform_indices = @transform_1, window_bounds = array<i64: 2, 32>}, {transform_indices = @transform_2, window_bounds = array<i64: 32, 64>}, {transform_indices = @transform_3, window_bounds = array<i64: 1, 64>}, {transform_indices = @transform_4, window_bounds = array<i64: 2, 16>}]} {
    %c0_i32 = arith.constant 0 : i32
    %0 = arith.cmpi eq, %arg1, %c0_i32 : i32
    %1 = arith.extui %0 : i1 to i32
    %c0_i32_0 = arith.constant 0 : i32
    %2 = arith.cmpi ne, %1, %c0_i32_0 : i32
    scf.if %2 {
      %cst_17 = arith.constant 0.000000e+00 : f32
      %31 = vector.broadcast %cst_17 : f32 to vector<2x16xf32>
      %c0_18 = arith.constant 0 : index
      %c0_19 = arith.constant 0 : index
      %32 = vector.load %arg7[%c0_18, %c0_19] : memref<2x16xf32, #tpu.memory_space<vmem>>, vector<2x16xf32>
      tpu.vector_store %arg7[%c0_18, %c0_19], %31 {strides = array<i32>} : memref<2x16xf32, #tpu.memory_space<vmem>>, vector<2x16xf32>,
    } else {
    }
    %c0 = arith.constant 0 : index
    %c0_1 = arith.constant 0 : index
    %c0_2 = arith.constant 0 : index
    %3 = vector.load %arg2[%c0, %c0_1, %c0_2] : memref<2x16x32xf32, #tpu.memory_space<vmem>>, vector<2x16x32xf32>
    %4 = vector.shape_cast %3 : vector<2x16x32xf32> to vector<32x32xf32>
    %c0_3 = arith.constant 0 : index
    %c0_4 = arith.constant 0 : index
    %5 = vector.load %arg4[%c0_3, %c0_4] : memref<32x64xf32, #tpu.memory_space<vmem>>, vector<32x64xf32>
    %cst = arith.constant dense<0.000000e+00> : vector<32x64xf32>
    %6 = tpu.matmul %4, %5, %cst {dimension_numbers = #tpu.dot_dimension_numbers<[1], [0], [0], [1], [0, 0, 1, 1], [], []>} : vector<32x32xf32>, vector<32x64xf32>, vector<32x64xf32> -> vector<32x64xf32>
    %c0_5 = arith.constant 0 : index
    %c0_6 = arith.constant 0 : index
    %7 = vector.load %arg5[%c0_5, %c0_6] : memref<1x64xf32, #tpu.memory_space<vmem>>, vector<1x64xf32>
    %8 = vector.broadcast %7 : vector<1x64xf32> to vector<32x64xf32>
    %9 = arith.addf %6, %8 : vector<32x64xf32>
    %10 = vector.extract_strided_slice %9 {offsets = [0, 0], sizes = [32, 32], strides = [1, 1]} : vector<32x64xf32> to vector<32x32xf32>
    %11 = math.tanh %10 : vector<32x32xf32>
    %12 = vector.extract_strided_slice %9 {offsets = [0, 32], sizes = [32, 32], strides = [1, 1]} : vector<32x64xf32> to vector<32x32xf32>
    %13 = arith.negf %12 : vector<32x32xf32>
    %14 = math.exp %13 : vector<32x32xf32>
    %cst_7 = arith.constant 1.000000e+00 : f32
    %15 = vector.broadcast %cst_7 : f32 to vector<32x32xf32>
    %16 = arith.addf %15, %14 : vector<32x32xf32>
    %17 = arith.divf %15, %16 : vector<32x32xf32>
    %18 = arith.mulf %11, %17 : vector<32x32xf32>
    %19 = vector.shape_cast %18 : vector<32x32xf32> to vector<2x16x32xf32>
    %c0_8 = arith.constant 0 : index
    %c0_9 = arith.constant 0 : index
    %20 = vector.load %arg3[%c0_8, %c0_9] : memref<2x32xf32, #tpu.memory_space<vmem>>, vector<2x32xf32>
    %21 = vector.shape_cast %20 : vector<2x32xf32> to vector<2x1x32xf32>
    %22 = vector.broadcast %21 : vector<2x1x32xf32> to vector<2x16x32xf32>
    %23 = arith.mulf %19, %22 : vector<2x16x32xf32>
    %c0_10 = arith.constant 0 : index
    %c0_11 = arith.constant 0 : index
    %24 = vector.load %arg7[%c0_10, %c0_11] : memref<2x16xf32, #tpu.memory_space<vmem>>, vector<2x16xf32>
    %cst_12 = arith.constant dense<0.000000e+00> : vector<2x16xf32>
    %25 = vector.multi_reduction <add>, %23, %cst_12 [2] : vector<2x16x32xf32> to vector<2x16xf32>
    %26 = arith.addf %24, %25 : vector<2x16xf32>
    %c0_13 = arith.constant 0 : index
    %c0_14 = arith.constant 0 : index
    %27 = vector.load %arg7[%c0_13, %c0_14] : memref<2x16xf32, #tpu.memory_space<vmem>>, vector<2x16xf32>
    tpu.vector_store %arg7[%c0_13, %c0_14], %26 {strides = array<i32>} : memref<2x16xf32, #tpu.memory_space<vmem>>, vector<2x16xf32>,
    %c0_i32_15 = arith.constant 0 : i32
    %28 = arith.cmpi eq, %arg1, %c0_i32_15 : i32
    %29 = arith.extui %28 : i1 to i32
    %c0_i32_16 = arith.constant 0 : i32
    %30 = arith.cmpi ne, %29, %c0_i32_16 : i32
    scf.if %30 {
      %c0_17 = arith.constant 0 : index
      %c0_18 = arith.constant 0 : index
      %31 = vector.load %arg7[%c0_17, %c0_18] : memref<2x16xf32, #tpu.memory_space<vmem>>, vector<2x16xf32>
      %cst_19 = arith.constant dense<0xFF800000> : vector<2xf32>
      %32 = vector.multi_reduction <maximumf>, %31, %cst_19 [1] : vector<2x16xf32> to vector<2xf32>
      %33 = vector.shape_cast %32 : vector<2xf32> to vector<2x1xf32>
      %34 = vector.broadcast %33 : vector<2x1xf32> to vector<2x16xf32>
      %35 = arith.subf %31, %34 : vector<2x16xf32>
      %36 = math.exp %35 : vector<2x16xf32>
      %cst_20 = arith.constant dense<0.000000e+00> : vector<2xf32>
      %37 = vector.multi_reduction <add>, %36, %cst_20 [1] : vector<2x16xf32> to vector<2xf32>
      %38 = vector.shape_cast %37 : vector<2xf32> to vector<2x1xf32>
      %39 = tpu.reciprocal %38 {approx = true} : vector<2x1xf32> -> vector<2x1xf32>
      %40 = vector.broadcast %39 : vector<2x1xf32> to vector<2x16xf32>
      %41 = arith.mulf %36, %40 : vector<2x16xf32>
      %c0_21 = arith.constant 0 : index
      %c0_22 = arith.constant 0 : index
      %42 = vector.load %arg6[%c0_21, %c0_22] : memref<2x16xf32, #tpu.memory_space<vmem>>, vector<2x16xf32>
      tpu.vector_store %arg6[%c0_21, %c0_22], %41 {strides = array<i32>} : memref<2x16xf32, #tpu.memory_space<vmem>>, vector<2x16xf32>,
    } else {
    }
    return
  }
  func.func @transform_0(%arg0: i32, %arg1: i32) -> (i32, i32, i32) {
    %c0_i32 = arith.constant 0 : i32
    %c0_i32_0 = arith.constant 0 : i32
    %c0_i32_1 = arith.constant 0 : i32
    return %arg0, %c0_i32, %c0_i32_0 : i32, i32, i32
  }
  func.func @transform_1(%arg0: i32, %arg1: i32) -> (i32, i32) {
    %c0_i32 = arith.constant 0 : i32
    return %arg0, %arg1 : i32, i32
  }
  func.func @transform_2(%arg0: i32, %arg1: i32) -> (i32, i32) {
    %c0_i32 = arith.constant 0 : i32
    %c0_i32_0 = arith.constant 0 : i32
    return %c0_i32, %arg1 : i32, i32
  }
  func.func @transform_3(%arg0: i32, %arg1: i32) -> (i32, i32) {
    %c0_i32 = arith.constant 0 : i32
    %c0_i32_0 = arith.constant 0 : i32
    return %c0_i32, %arg1 : i32, i32
  }
  func.func @transform_4(%arg0: i32, %arg1: i32) -> (i32, i32) {
    %c0_i32 = arith.constant 0 : i32
    %c0_i32_0 = arith.constant 0 : i32
    return %arg0, %c0_i32 : i32, i32
  }
}

</mosaic_0001>

<llo_original>
// kernel: tpu_custom_call.1
$region0: #{tpu_custom_call.1}
  #allocation0 [shape = 'u32[]', space=smem, size = 0x4, offset = 0x4, fixed_abs, tag = 'smem constant byte address 0x4 - core index']
  #allocation1 [shape = 'u32[72,128]{1,0:T(1,128)}', space=vmem, size = 0x9000, scoped, tag = 'internal scratch']
  #allocation2 [shape = 'f32[2,16]{1,0:T(2,128)}', space=vmem, size = 0x400, scoped, tag = 'scratch operand']
  %s0 = inlined_call_operand.hbm [shape: f32[2,16,32], index: 0, kind: input, shape index: {}]
  %s1 = inlined_call_operand.hbm [shape: f32[2,32], index: 1, kind: input, shape index: {}]
  %s2 = inlined_call_operand.hbm [shape: f32[32,64], index: 2, kind: input, shape index: {}]
  %s3 = inlined_call_operand.vmem [shape: f32[1,64], index: 3, kind: input, shape index: {}]
  %s4 = inlined_call_operand.hbm [shape: f32[2,16], index: 4, kind: output, shape index: {}]
  %s5 = sld [smem:[#allocation0]]
  $region46: #{tpu_custom_call.1} parent=0
    _
  %s7 = ssub.s32 1, %s5
  %s8 = scalar_select 0, %s7, %s5
  $region1: #{tpu_custom_call.1} parent=0
    #allocation3 [shape = 'u8[16384]{0}', space=vmem, size = 0x4000, scoped, tag = 'input window, operand 0, single buffered']
    #allocation4 [shape = 's32[1]{0}', space=sflag, size = 0x4, scoped, tag = 'scoped memory for tpu_custom_call.1']
    #allocation5 [shape = 's32[1]{0}', space=sflag, size = 0x4, scoped, tag = 'scoped memory for tpu_custom_call.1']
    #allocation6 [shape = 'u8[1024]{0}', space=vmem, size = 0x400, scoped, tag = 'input window, operand 1, single buffered']
    #allocation7 [shape = 's32[1]{0}', space=sflag, size = 0x4, scoped, tag = 'scoped memory for tpu_custom_call.1']
    #allocation8 [shape = 'u8[16384]{0}', space=vmem, size = 0x4000, scoped, tag = 'input window, operand 2, single buffered']
    #allocation9 [shape = 'u8[1024]{0}', space=vmem, size = 0x400, scoped, tag = 'output window, operand 0, single buffered']
    %9 = vsyncpa [#allocation4], 0
    %10 = vsyncpa [#allocation7], 0
    %11 = vsyncpa [#allocation5], 0
    // Predicated region
    $region2: #{tpu_custom_call.1} parent=1 // pred_check
      _
    $region3: #{tpu_custom_call.1} parent=1 // pred_check_branch
      %13 = sbr.rel (0) target = $region5
    $region4: #{tpu_custom_call.1} parent=1 // pred_region
      %15 = vsyncadd [#allocation4], 0
      %s16 = sshll.u32 %s0, 4
      %s17 = int_to_ptr.hbm [resolvable:$true] %s16
      %s18 = sshll.u32 [#allocation3], 4
      %s19 = int_to_ptr.vmem [resolvable:$true] %s18
      %24 = dma.hbm_to_vmem [thread:$0]  %s17, 512, %s19, [#allocation4], 128, 128, 8
    $region5: #{tpu_custom_call.1} parent=1 // pred_fallthru
      _
    // Predicated region
    $region6: #{tpu_custom_call.1} parent=1 // pred_check
      _
    $region7: #{tpu_custom_call.1} parent=1 // pred_check_branch
      %26 = sbr.rel (0) target = $region9
    $region8: #{tpu_custom_call.1} parent=1 // pred_region
      %28 = vsyncadd [#allocation7], 0
      %s30 = sshll.u32 %s1, 4
      %s31 = int_to_ptr.hbm [resolvable:$true] %s30
      %s32 = sshll.u32 [#allocation6], 4
      %s33 = int_to_ptr.vmem [resolvable:$true] %s32
      %35 = dma.hbm_to_vmem [thread:$0]  %s31, 32, %s33, [#allocation7]
    $region9: #{tpu_custom_call.1} parent=1 // pred_fallthru
      _
    // Predicated region
    $region10: #{tpu_custom_call.1} parent=1 // pred_check
      _
    $region11: #{tpu_custom_call.1} parent=1 // pred_check_branch
      %37 = sbr.rel (0) target = $region13
    $region12: #{tpu_custom_call.1} parent=1 // pred_region
      %39 = vsyncadd [#allocation7], 0
      %s40 = sshll.u32 %s2, 4
      %s41 = int_to_ptr.hbm [resolvable:$true] %s40
      %s42 = sshll.u32 [#allocation8], 4
      %s43 = int_to_ptr.vmem [resolvable:$true] %s42
      %48 = dma.hbm_to_vmem [thread:$0]  %s41, 512, %s43, [#allocation7], 128, 128, 8
    $region13: #{tpu_custom_call.1} parent=1 // pred_fallthru
      _
    // Predicated region
    $region14: #{tpu_custom_call.1} parent=1 // pred_check
      _
    $region15: #{tpu_custom_call.1} parent=1 // pred_check_branch
      %50 = sbr.rel (0) target = $region17
    $region16: #{tpu_custom_call.1} parent=1 // pred_region
      _
    $region17: #{tpu_custom_call.1} parent=1 // pred_fallthru
      _
    // Predicated region
    $region18: #{tpu_custom_call.1} parent=1 // pred_check
      _
    $region19: #{tpu_custom_call.1} parent=1 // pred_check_branch
      %52 = sbr.rel (0) target = $region21
    $region20: #{tpu_custom_call.1} parent=1 // pred_region
      %54 = dma.done [#allocation4], 512
    $region21: #{tpu_custom_call.1} parent=1 // pred_fallthru
      _
    // Predicated region
    $region22: #{tpu_custom_call.1} parent=1 // pred_check
      _
    $region23: #{tpu_custom_call.1} parent=1 // pred_check_branch
      %56 = sbr.rel (0) target = $region25
    $region24: #{tpu_custom_call.1} parent=1 // pred_region
      %58 = dma.done [#allocation7], 32
    $region25: #{tpu_custom_call.1} parent=1 // pred_fallthru
      _
    // Predicated region
    $region26: #{tpu_custom_call.1} parent=1 // pred_check
      _
    $region27: #{tpu_custom_call.1} parent=1 // pred_check_branch
      %60 = sbr.rel (0) target = $region29
    $region28: #{tpu_custom_call.1} parent=1 // pred_region
      %62 = dma.done [#allocation7], 512
    $region29: #{tpu_custom_call.1} parent=1 // pred_fallthru
      _
    %p63 = scmp.eq.s32.totalorder 0, 0
    // Predicated region
    $region30: #{tpu_custom_call.1} parent=1 // pred_check
      %p64 = pneg %p63
    $region31: #{tpu_custom_call.1} parent=1 // pred_check_branch
      %66 = sbr.rel (%p64) target = $region33
    $region32: #{tpu_custom_call.1} parent=1 // pred_region
      %vm67 = vcmask 123904
      %68 = vst.msk [vmem:[#allocation2] sm:$0x3] %vm67, 0.0
    $region33: #{tpu_custom_call.1} parent=1 // pred_fallthru
      _
    %v69 = vld [vmem:[#allocation3] sm:$0xff]
    %v70 = vld [vmem:[#allocation3 + $0x8] sm:$0xff]
    %v71 = vld [vmem:[#allocation3 + $0x10] sm:$0xff]
    %v72 = vld [vmem:[#allocation3 + $0x18] sm:$0xff]
    %v73 = vld [vmem:[#allocation8] sm:$0xff]
    %v74 = vld [vmem:[#allocation8 + $0x8] sm:$0xff]
    %v75 = vld [vmem:[#allocation8 + $0x10] sm:$0xff]
    %v76 = vld [vmem:[#allocation8 + $0x18] sm:$0xff]
    %v77 = vld [vmem:[%s3] sm:$0x1]
    %v79 = vperm.slane %v77, 0
    %vm81 = vcmask 261120
    %v83 = vsel %vm81, %v69, 0
    %v86 = vsel %vm81, %v70, 0
    %v89 = vsel %vm81, %v71, 0
    %v92 = vsel %vm81, %v72, 0
    %94 = vmatpush.msra.mxu0 0.0
    %95 = vmatpush.msra.mxu0 0.0
    %96 = vmatpush.msra.mxu0 0.0
    %97 = vmatpush.msra.mxu0 0.0
    %98 = vmatpush.msra.mxu0 0.0
    %99 = vmatpush.msra.mxu0 0.0
    %100 = vmatpush.msra.mxu0 0.0
    %101 = vmatpush.msra.mxu0 0.0
    %102 = vmatpush.msra.mxu0 0.0
    %103 = vmatpush.msra.mxu0 0.0
    %104 = vmatpush.msra.mxu0 0.0
    %105 = vmatpush.msra.mxu0 0.0
    %106 = vmatpush.msra.mxu0 %v76
    %107 = vmatpush.msra.mxu0 %v75
    %108 = vmatpush.msra.mxu0 %v74
    %109 = vmatpush.msra.mxu0 %v73
    %110 = vmatmul.f32.gmra.mxu0 %v83
    %v111 = vpop.f32.mrf.mxu0
    %v112 = vadd.f32 %v79, %v111
    %113 = vmatmul.f32.gmra.mxu0 %v86
    %v114 = vpop.f32.mrf.mxu0
    %v115 = vadd.f32 %v79, %v114
    %116 = vmatmul.f32.gmra.mxu0 %v89
    %v117 = vpop.f32.mrf.mxu0
    %v118 = vadd.f32 %v79, %v117
    %119 = vmatmul.f32.gmra.mxu0 %v92
    %v120 = vpop.f32.mrf.mxu0
    %v121 = vadd.f32 %v79, %v120
    %122 = vdwg.mxu0
    %v123 = vtanh.pop %v112
    %v124 = vtanh.pop %v115
    %v125 = vtanh.pop %v118
    %v126 = vtanh.pop %v121
    %v127 = vxor.u32 %v112, 2147483648
    %v128 = vxor.u32 %v115, 2147483648
    %v129 = vxor.u32 %v118, 2147483648
    %v130 = vxor.u32 %v121, 2147483648
    %v131 = vmul.f32 %v127, 1.442695
    %v132 = vpow.pop %v131
    %v133 = vmul.f32 %v128, 1.442695
    %v134 = vpow.pop %v133
    %v135 = vmul.f32 %v129, 1.442695
    %v136 = vpow.pop %v135
    %v137 = vmul.f32 %v130, 1.442695
    %v138 = vpow.pop %v137
    %v139 = vadd.f32 %v132, 1.0
    %v140 = vadd.f32 %v134, 1.0
    %v141 = vadd.f32 %v136, 1.0
    %v142 = vadd.f32 %v138, 1.0
    %v143 = vrcp.pop %v139
    %v144 = vmul.f32 %v139, %v143
    %v145 = vsub.f32 1.0, %v144
    %v146 = vmul.f32 %v143, %v145
    %v147 = vadd.f32 %v143, %v146
    %vm148 = vweird.f32 %v139
    %vm149 = vweird.f32 %v143
    %vm150 = vmor %vm148, %vm149
    %v151 = vsel %vm150, %v143, %v147
    %v152 = vand.u32 2147483647, %v139
    %vm153 = vcmp.eq.f32.partialorder %v152, 8.507059e+37
    %v154 = vand.u32 %v139, 2147483648
    %v155 = vor.u32 1.1754944e-38, %v154
    %v156 = vsel %vm153, %v155, %v151
    %v157 = vmul.f32 1.0, %v156
    %v158 = vrcp.pop %v140
    %v159 = vmul.f32 %v140, %v158
    %v160 = vsub.f32 1.0, %v159
    %v161 = vmul.f32 %v158, %v160
    %v162 = vadd.f32 %v158, %v161
    %vm163 = vweird.f32 %v140
    %vm164 = vweird.f32 %v158
    %vm165 = vmor %vm163, %vm164
    %v166 = vsel %vm165, %v158, %v162
    %v167 = vand.u32 2147483647, %v140
    %vm168 = vcmp.eq.f32.partialorder %v167, 8.507059e+37
    %v169 = vand.u32 %v140, 2147483648
    %v170 = vor.u32 1.1754944e-38, %v169
    %v171 = vsel %vm168, %v170, %v166
    %v172 = vmul.f32 1.0, %v171
    %v173 = vrcp.pop %v141
    %v174 = vmul.f32 %v141, %v173
    %v175 = vsub.f32 1.0, %v174
    %v176 = vmul.f32 %v173, %v175
    %v177 = vadd.f32 %v173, %v176
    %vm178 = vweird.f32 %v141
    %vm179 = vweird.f32 %v173
    %vm180 = vmor %vm178, %vm179
    %v181 = vsel %vm180, %v173, %v177
    %v182 = vand.u32 2147483647, %v141
    %vm183 = vcmp.eq.f32.partialorder %v182, 8.507059e+37
    %v184 = vand.u32 %v141, 2147483648
    %v185 = vor.u32 1.1754944e-38, %v184
    %v186 = vsel %vm183, %v185, %v181
    %v187 = vmul.f32 1.0, %v186
    %v188 = vrcp.pop %v142
    %v189 = vmul.f32 %v142, %v188
    %v190 = vsub.f32 1.0, %v189
    %v191 = vmul.f32 %v188, %v190
    %v192 = vadd.f32 %v188, %v191
    %vm193 = vweird.f32 %v142
    %vm194 = vweird.f32 %v188
    %vm195 = vmor %vm193, %vm194
    %v196 = vsel %vm195, %v188, %v192
    %v197 = vand.u32 2147483647, %v142
    %vm198 = vcmp.eq.f32.partialorder %v197, 8.507059e+37
    %v199 = vand.u32 %v142, 2147483648
    %v200 = vor.u32 1.1754944e-38, %v199
    %v201 = vsel %vm198, %v200, %v196
    %v202 = vmul.f32 1.0, %v201
    %207 = vrot.lane.b32.xlu0 %v157, 96
    %v208 = vpop.permute.xlu0 %207
    %209 = vrot.lane.b32.xlu0 %v172, 96
    %v210 = vpop.permute.xlu0 %209
    %211 = vrot.lane.b32.xlu0 %v187, 96
    %v212 = vpop.permute.xlu0 %211
    %213 = vrot.lane.b32.xlu0 %v202, 96
    %v214 = vpop.permute.xlu0 %213
    %v219 = vmul.f32 %v123, %v208
    %v220 = vmul.f32 %v124, %v210
    %v221 = vmul.f32 %v125, %v212
    %v222 = vmul.f32 %v126, %v214
    %v223 = vld [vmem:[#allocation6] sm:$0x3]
    %v225 = vrot.slane %v223, 1
    %v226 = vperm.slane %v223, 0
    %v227 = vperm.slane %v225, 0
    %v230 = vmul.f32 %v219, %v226
    %v231 = vmul.f32 %v220, %v226
    %v232 = vmul.f32 %v221, %v227
    %v233 = vmul.f32 %v222, %v227
    %v234 = vld [vmem:[#allocation2] sm:$0x3]
    %v235 = vsel %vm81, %v230, 0.0
    %236 = vadd.xlane.f32.xlu0 %v235
    %v237 = vpop.xlane.xlu0 %236
    %v238 = vsel %vm81, %v231, 0.0
    %239 = vadd.xlane.f32.xlu0 %v238
    %v240 = vpop.xlane.xlu0 %239
    %v241 = vsel %vm81, %v232, 0.0
    %242 = vadd.xlane.f32.xlu0 %v241
    %v243 = vpop.xlane.xlu0 %242
    %v244 = vsel %vm81, %v233, 0.0
    %245 = vadd.xlane.f32.xlu0 %v244
    %v246 = vpop.xlane.xlu0 %245
    %v251 = vlaneseq
    %v252 = vand.u32 %v251, 127
    %v253 = vperm.slane %v237, %v252
    %v254 = vadd.s32 %v252, 4294967288
    %v255 = vperm.slane %v240, %v254
    %vm256 = vcmask 130112
    %v257 = vsel %vm256, %v255, %v253
    %v258 = vperm.slane %v243, %v252
    %v259 = vperm.slane %v246, %v254
    %v260 = vsel %vm256, %v259, %v258
    %vm261 = vcmask 1041409
    %v262 = vsel %vm261, %v260, %v257
    %v264 = vadd.f32 %v234, %v262
    %vm265 = vcmask 123904
    %266 = vst.msk [vmem:[#allocation2] sm:$0x3] %vm265, %v264
    // Predicated region
    $region34: #{tpu_custom_call.1} parent=1 // pred_check
      %p267 = pneg %p63
    $region35: #{tpu_custom_call.1} parent=1 // pred_check_branch
      %269 = sbr.rel (%p267) target = $region37
    $region36: #{tpu_custom_call.1} parent=1 // pred_region
      %v270 = vld [vmem:[#allocation2] sm:$0x3]
      %v271 = vsel %vm265, %v270, -inf
      %272 = vmax.xlane.f32.xlu0 %v271
      %v273 = vpop.xlane.xlu0 %272
      %v274 = vsub.f32 %v270, %v273
      %v275 = vmul.f32 %v274, 1.442695
      %v276 = vpow.pop %v275
      %v277 = vsel %vm265, %v276, 0.0
      %278 = vadd.xlane.f32.xlu0 %v277
      %v279 = vpop.xlane.xlu0 %278
      %v280 = vrcp.pop %v279
      %v281 = vmul.f32 %v276, %v280
      %282 = vst.msk [vmem:[#allocation9] sm:$0x3] %vm265, %v281
    $region37: #{tpu_custom_call.1} parent=1 // pred_fallthru
      _
    // Predicated region
    $region38: #{tpu_custom_call.1} parent=1 // pred_check
      _
    $region39: #{tpu_custom_call.1} parent=1 // pred_check_branch
      %284 = sbr.rel (0) target = $region41
    $region40: #{tpu_custom_call.1} parent=1 // pred_region
      %286 = vsyncadd [#allocation5], 0
      %s288 = sshll.u32 [#allocation9], 4
      %s289 = int_to_ptr.vmem [resolvable:$true] %s288
      %s290 = sshll.u32 %s4, 4
      %s291 = int_to_ptr.hbm [resolvable:$true] %s290
      %293 = dma.vmem_to_hbm [thread:$0]  %s289, 32, %s291, [#allocation5]
    $region41: #{tpu_custom_call.1} parent=1 // pred_fallthru
      _
    // Predicated region
    $region42: #{tpu_custom_call.1} parent=1 // pred_check
      _
    $region43: #{tpu_custom_call.1} parent=1 // pred_check_branch
      %295 = sbr.rel (0) target = $region45
    $region44: #{tpu_custom_call.1} parent=1 // pred_region
      %297 = dma.done [#allocation5], 32
    $region45: #{tpu_custom_call.1} parent=1 // pred_fallthru
      _
    %298 = vsyncpa [#allocation4], 1
    %299 = vsyncpa [#allocation7], 1
    %300 = vsyncpa [#allocation5], 1

</llo_original>
